<compile_context>
chip_gen: v6e
topology: v6e:2x2x1
jax: 0.10.0
libtpu: 0.0.40
codegen_flags: <defaults>
</compile_context>

<pallas_src>
import jax
import jax.numpy as jnp
from jax.experimental import pallas as pl
from jax.experimental.pallas import tpu as pltpu


def _predictor_kernel(x_ref, w1_ref, b1_ref, w23_ref, b23_ref, out_ref):
    # x_ref:   (tm, pack*d_in)   f32 (cast to bf16 in-register below)
    # w1_ref:  (pack*d_in, pack*d_mid)  bf16, block-diagonal
    # b1_ref:  (1, pack*d_mid)   f32
    # w23_ref: (pack*d_mid, pack*d_out) f32, block-diagonal (W2@W3 folded)
    # b23_ref: (1, pack*d_out)   f32
    x = x_ref[...].astype(jnp.bfloat16)

    # Layer 1: Linear(in, mid) + ReLU   (bf16 MXU, f32 accumulate/epilogue)
    h = jnp.dot(x, w1_ref[...], preferred_element_type=jnp.float32)
    h = jnp.maximum(h + b1_ref[...], 0.0)

    # Folded Layer 2 + output Linear (mid -> out), then Sigmoid.  Kept in f32:
    # tiny matmul, avoids a bf16 repack of h.
    y = jnp.dot(h, w23_ref[...], preferred_element_type=jnp.float32)
    out_ref[...] = jax.nn.sigmoid(y + b23_ref[...]).astype(out_ref.dtype)


def predictor_layer(x, w1, b1, w2, b2, w3, b3, *, tile_rows=16384):
    """x: (N, d_in) f32 (or bf16).  Weights as (in, out), biases as (1, out).

    Returns (N, d_out) f32.  `tile_rows` is the row tile in *logical* rows.
    """
    n, d_in = x.shape
    d_out = w3.shape[1]

    # Logical rows packed per physical row so the feature axis fills all 128
    # lanes (4 for d_in = 32).  Falls back to 1 if d_in does not divide 128.
    pack = 128 // d_in if (d_in <= 128 and 128 % d_in == 0) else 1

    # --- tiny weight prep (O(d^2), independent of N) -----------------------
    # Fold Linear(mid,mid) -> Dropout(eval) -> Linear(mid,out) into one affine.
    w23 = w2 @ w3                                     # (mid, out)  f32
    b23 = b2 @ w3 + b3                                # (1,  out)   f32
    eye = jnp.eye(pack, dtype=jnp.float32)
    w1p = jnp.kron(eye, w1).astype(jnp.bfloat16)      # (pack*in,  pack*mid)
    w23p = jnp.kron(eye, w23).astype(jnp.float32)     # (pack*mid, pack*out)
    b1p = jnp.tile(b1.astype(jnp.float32), (1, pack))   # (1, pack*mid)
    b23p = jnp.tile(b23.astype(jnp.float32), (1, pack))  # (1, pack*out)

    # --- pack rows: (N, d_in) -> (N/pack, pack*d_in) (free row-major view) --
    n_align = 8 * pack                      # 8 sublanes x pack logical rows
    n_pad = -(-n // n_align) * n_align
    if n_pad != n:
        # Only taken for ragged N; aligned inputs never touch HBM here.
        # TODO(synk): handle the ragged tail in-kernel to avoid this pad copy.
        x = jnp.pad(x, ((0, n_pad - n), (0, 0)))
    n_phys = n_pad // pack
    xp = x.reshape(n_phys, pack * d_in)

    # --- row tile (packed rows): large for roofline, >= 2 grid steps for the
    # two v7x TensorCores, 8-aligned, clamped for small N.
    tile_phys = max(8, (tile_rows // pack // 8) * 8)
    half = -(-n_phys // 2)
    half8 = -(-half // 8) * 8
    tm = max(8, min(tile_phys, half8))

    grid = (pl.cdiv(n_phys, tm),)

    out = pl.pallas_call(
        _predictor_kernel,
        out_shape=jax.ShapeDtypeStruct((n_phys, pack * d_out), jnp.float32),
        grid=grid,
        in_specs=[
            # x: row-tiled, double-buffered across the grid (dominant DMA).
            pl.BlockSpec((tm, pack * d_in), lambda i: (i, 0)),
            # weights / biases: constant block index -> fetched once, resident.
            pl.BlockSpec(w1p.shape, lambda i: (0, 0)),
            pl.BlockSpec(b1p.shape, lambda i: (0, 0)),
            pl.BlockSpec(w23p.shape, lambda i: (0, 0)),
            pl.BlockSpec(b23p.shape, lambda i: (0, 0)),
        ],
        out_specs=pl.BlockSpec((tm, pack * d_out), lambda i: (i, 0)),
        compiler_params=pltpu.CompilerParams(
            dimension_semantics=("parallel",),   # shard row tiles across TCs
            vmem_limit_bytes=32 << 20,           # safe on v5e/v6e/v7x
        ),
    )(xp, w1p, b1p, w23p, b23p)

    # (N/pack, pack*d_out) -> (N, d_out): free row-major reshape, then un-pad.
    return out.reshape(n_phys * pack, d_out)[:n]


def _init_linear(key, dim_in, dim_out):
    """Deterministic init mimicking nn.Linear (kaiming-uniform-ish bounds)."""
    kw, kb = jax.random.split(key)
    bound = 1.0 / jnp.sqrt(dim_in)
    # Stored directly as (in, out), i.e. torch W.T
    w = jax.random.uniform(kw, (dim_in, dim_out), jnp.float32, -bound, bound)
    b = jax.random.uniform(kb, (1, dim_out), jnp.float32, -bound, bound)
    return w, b


if __name__ == "__main__":
    batch, seq = 2, 8
    dim_in, dim_mid, dim_out = 32, 32, 1

    key = jax.random.PRNGKey(0)
    kx, k1, k2, k3 = jax.random.split(key, 4)

    # batch input of shape (batch, seq, dim_predict_in), flattened for kernel
    x_bsd = jax.random.normal(kx, (batch, seq, dim_in), jnp.float32)
    x = x_bsd.reshape(batch * seq, dim_in)

    w1, b1 = _init_linear(k1, dim_in, dim_mid)
    w2, b2 = _init_linear(k2, dim_mid, dim_mid)
    w3, b3 = _init_linear(k3, dim_mid, dim_out)

    out = predictor_layer(x, w1, b1, w2, b2, w3, b3)
    out = out.reshape(batch, seq, dim_out)
    jax.block_until_ready(out)

    # Reference in plain JAX f32 (same math as the torch module in eval mode).
    ref = jnp.maximum(x @ w1 + b1, 0.0)
    ref = ref @ w2 + b2
    ref = jax.nn.sigmoid(ref @ w3 + b3).reshape(batch, seq, dim_out)

    # bf16 first-layer MXU operands loosen tolerance vs. the pure-f32
    # reference; sigmoid outputs live in [0,1] so 2e-2 absolute is meaningful.
    assert jnp.allclose(out, ref, atol=2e-2, rtol=2e-2), (
        "mismatch vs reference: max abs diff = "
        f"{float(jnp.max(jnp.abs(out - ref)))}")

    print("KERNEL_OK")
</pallas_src>

<mosaic_0001>
module attributes {stable_mosaic.version = 11 : i64} {
  func.func @_predictor_kernel(%arg0: i32, %arg1: memref<8x128xf32, #tpu.memory_space<vmem>>, %arg2: memref<128x128xbf16, #tpu.memory_space<vmem>>, %arg3: memref<1x128xf32, #tpu.memory_space<vmem>>, %arg4: memref<128x4xf32, #tpu.memory_space<vmem>>, %arg5: memref<1x4xf32, #tpu.memory_space<vmem>>, %arg6: memref<8x4xf32, #tpu.memory_space<vmem>>) attributes {dimension_semantics = [#tpu.dimension_semantics<parallel>], iteration_bounds = array<i64: 1>, scalar_prefetch = 0 : i64, scratch_operands = 0 : i64, tpu.core_type = #tpu.core_type<tc>, window_params = [{transform_indices = @transform_0, window_bounds = array<i64: 8, 128>}, {pipeline_mode = #tpu.pipeline_mode<synchronous>, transform_indices = @transform_1, window_bounds = array<i64: 128, 128>}, {pipeline_mode = #tpu.pipeline_mode<synchronous>, transform_indices = @transform_2, window_bounds = array<i64: 1, 128>}, {pipeline_mode = #tpu.pipeline_mode<synchronous>, transform_indices = @transform_3, window_bounds = array<i64: 128, 4>}, {pipeline_mode = #tpu.pipeline_mode<synchronous>, transform_indices = @transform_4, window_bounds = array<i64: 1, 4>}, {transform_indices = @transform_5, window_bounds = array<i64: 8, 4>}]} {
    %c0 = arith.constant 0 : index
    %c0_0 = arith.constant 0 : index
    %0 = vector.load %arg1[%c0, %c0_0] : memref<8x128xf32, #tpu.memory_space<vmem>>, vector<8x128xf32>
    %1 = arith.truncf %0 : vector<8x128xf32> to vector<8x128xbf16>
    %c0_1 = arith.constant 0 : index
    %c0_2 = arith.constant 0 : index
    %2 = vector.load %arg2[%c0_1, %c0_2] : memref<128x128xbf16, #tpu.memory_space<vmem>>, vector<128x128xbf16>
    %cst = arith.constant dense<0.000000e+00> : vector<8x128xf32>
    %3 = tpu.matmul %1, %2, %cst {dimension_numbers = #tpu.dot_dimension_numbers<[1], [0], [0], [1], [0, 0, 1, 1], [], []>} : vector<8x128xbf16>, vector<128x128xbf16>, vector<8x128xf32> -> vector<8x128xf32>
    %c0_3 = arith.constant 0 : index
    %c0_4 = arith.constant 0 : index
    %4 = vector.load %arg3[%c0_3, %c0_4] : memref<1x128xf32, #tpu.memory_space<vmem>>, vector<1x128xf32>
    %5 = vector.broadcast %4 : vector<1x128xf32> to vector<8x128xf32>
    %6 = arith.addf %3, %5 : vector<8x128xf32>
    %cst_5 = arith.constant 0.000000e+00 : f32
    %7 = vector.broadcast %cst_5 : f32 to vector<8x128xf32>
    %8 = arith.maximumf %6, %7 : vector<8x128xf32>
    %c0_6 = arith.constant 0 : index
    %c0_7 = arith.constant 0 : index
    %9 = vector.load %arg4[%c0_6, %c0_7] : memref<128x4xf32, #tpu.memory_space<vmem>>, vector<128x4xf32>
    %cst_8 = arith.constant dense<0.000000e+00> : vector<8x4xf32>
    %10 = tpu.matmul %8, %9, %cst_8 {dimension_numbers = #tpu.dot_dimension_numbers<[1], [0], [0], [1], [0, 0, 1, 1], [], []>} : vector<8x128xf32>, vector<128x4xf32>, vector<8x4xf32> -> vector<8x4xf32>
    %c0_9 = arith.constant 0 : index
    %c0_10 = arith.constant 0 : index
    %11 = vector.load %arg5[%c0_9, %c0_10] : memref<1x4xf32, #tpu.memory_space<vmem>>, vector<1x4xf32>
    %12 = vector.broadcast %11 : vector<1x4xf32> to vector<8x4xf32>
    %13 = arith.addf %10, %12 : vector<8x4xf32>
    %14 = arith.negf %13 : vector<8x4xf32>
    %15 = math.exp %14 : vector<8x4xf32>
    %cst_11 = arith.constant 1.000000e+00 : f32
    %16 = vector.broadcast %cst_11 : f32 to vector<8x4xf32>
    %17 = arith.addf %16, %15 : vector<8x4xf32>
    %18 = arith.divf %16, %17 : vector<8x4xf32>
    %c0_12 = arith.constant 0 : index
    %c0_13 = arith.constant 0 : index
    %19 = vector.load %arg6[%c0_12, %c0_13] : memref<8x4xf32, #tpu.memory_space<vmem>>, vector<8x4xf32>
    tpu.vector_store %arg6[%c0_12, %c0_13], %18 {strides = array<i32>} : memref<8x4xf32, #tpu.memory_space<vmem>>, vector<8x4xf32>,
    return
  }
  func.func @transform_0(%arg0: i32) -> (i32, i32) {
    %c0_i32 = arith.constant 0 : i32
    %c0_i32_0 = arith.constant 0 : i32
    return %arg0, %c0_i32 : i32, i32
  }
  func.func @transform_1(%arg0: i32) -> (i32, i32) {
    %c0_i32 = arith.constant 0 : i32
    %c0_i32_0 = arith.constant 0 : i32
    %c0_i32_1 = arith.constant 0 : i32
    return %c0_i32, %c0_i32_0 : i32, i32
  }
  func.func @transform_2(%arg0: i32) -> (i32, i32) {
    %c0_i32 = arith.constant 0 : i32
    %c0_i32_0 = arith.constant 0 : i32
    %c0_i32_1 = arith.constant 0 : i32
    return %c0_i32, %c0_i32_0 : i32, i32
  }
  func.func @transform_3(%arg0: i32) -> (i32, i32) {
    %c0_i32 = arith.constant 0 : i32
    %c0_i32_0 = arith.constant 0 : i32
    %c0_i32_1 = arith.constant 0 : i32
    return %c0_i32, %c0_i32_0 : i32, i32
  }
  func.func @transform_4(%arg0: i32) -> (i32, i32) {
    %c0_i32 = arith.constant 0 : i32
    %c0_i32_0 = arith.constant 0 : i32
    %c0_i32_1 = arith.constant 0 : i32
    return %c0_i32, %c0_i32_0 : i32, i32
  }
  func.func @transform_5(%arg0: i32) -> (i32, i32) {
    %c0_i32 = arith.constant 0 : i32
    %c0_i32_0 = arith.constant 0 : i32
    return %arg0, %c0_i32 : i32, i32
  }
}

</mosaic_0001>

<llo_original>
// kernel: tpu_custom_call.1
$region0: #{tpu_custom_call.1}
  #allocation0 [shape = 'u32[]', space=smem, size = 0x4, offset = 0x4, fixed_abs, tag = 'smem constant byte address 0x4 - core index']
  #allocation1 [shape = 'u32[144,128]{1,0:T(1,128)}', space=vmem, size = 0x12000, scoped, tag = 'internal scratch']
  %s0 = inlined_call_operand.vmem [shape: f32[8,128], index: 0, kind: input, shape index: {}]
  %s1 = inlined_call_operand.vmem [shape: bf16[128,128], index: 1, kind: input, shape index: {}]
  %s2 = inlined_call_operand.vmem [shape: f32[1,128], index: 2, kind: input, shape index: {}]
  %s3 = inlined_call_operand.vmem [shape: f32[128,4], index: 3, kind: input, shape index: {}]
  %s4 = inlined_call_operand.vmem [shape: f32[1,4], index: 4, kind: input, shape index: {}]
  %s5 = inlined_call_operand.vmem [shape: f32[8,4], index: 5, kind: output, shape index: {}]
  %s6 = sld [smem:[#allocation0]]
  $region30: #{tpu_custom_call.1} parent=0
    _
  %s8 = ssub.s32 1, %s6
  %s9 = scalar_select 0, %s8, %s6
  // Predicated region
  $region2: #{tpu_custom_call.1} parent=0 // pred_check
    _
  $region3: #{tpu_custom_call.1} parent=0 // pred_check_branch
    %11 = sbr.rel (0) target = $region5
  $region4: #{tpu_custom_call.1} parent=0 // pred_region
    _
  $region5: #{tpu_custom_call.1} parent=0 // pred_fallthru
    _
  // Predicated region
  $region6: #{tpu_custom_call.1} parent=0 // pred_check
    _
  $region7: #{tpu_custom_call.1} parent=0 // pred_check_branch
    %13 = sbr.rel (0) target = $region9
  $region8: #{tpu_custom_call.1} parent=0 // pred_region
    _
  $region9: #{tpu_custom_call.1} parent=0 // pred_fallthru
    _
  // Predicated region
  $region10: #{tpu_custom_call.1} parent=0 // pred_check
    _
  $region11: #{tpu_custom_call.1} parent=0 // pred_check_branch
    %15 = sbr.rel (0) target = $region13
  $region12: #{tpu_custom_call.1} parent=0 // pred_region
    _
  $region13: #{tpu_custom_call.1} parent=0 // pred_fallthru
    _
  // Predicated region
  $region14: #{tpu_custom_call.1} parent=0 // pred_check
    _
  $region15: #{tpu_custom_call.1} parent=0 // pred_check_branch
    %17 = sbr.rel (0) target = $region17
  $region16: #{tpu_custom_call.1} parent=0 // pred_region
    _
  $region17: #{tpu_custom_call.1} parent=0 // pred_fallthru
    _
  // Predicated region
  $region18: #{tpu_custom_call.1} parent=0 // pred_check
    _
  $region19: #{tpu_custom_call.1} parent=0 // pred_check_branch
    %19 = sbr.rel (0) target = $region21
  $region20: #{tpu_custom_call.1} parent=0 // pred_region
    _
  $region21: #{tpu_custom_call.1} parent=0 // pred_fallthru
    _
  %v21 = vld [vmem:[%s0] sm:$0xff]
  %v22 = vpack.c.bf16 %v21, %v21
  %v23 = vld [vmem:[%s1] sm:$0xf]
  %v24 = vld [vmem:[%s1 + $0x4] sm:$0xf]
  %v25 = vld [vmem:[%s1 + $0x8] sm:$0xf]
  %v26 = vld [vmem:[%s1 + $0xc] sm:$0xf]
  %v27 = vld [vmem:[%s1 + $0x10] sm:$0xf]
  %v28 = vld [vmem:[%s1 + $0x14] sm:$0xf]
  %v29 = vld [vmem:[%s1 + $0x18] sm:$0xf]
  %v30 = vld [vmem:[%s1 + $0x1c] sm:$0xf]
  %v31 = vld [vmem:[%s1 + $0x20] sm:$0xf]
  %v32 = vld [vmem:[%s1 + $0x24] sm:$0xf]
  %v33 = vld [vmem:[%s1 + $0x28] sm:$0xf]
  %v34 = vld [vmem:[%s1 + $0x2c] sm:$0xf]
  %v35 = vld [vmem:[%s1 + $0x30] sm:$0xf]
  %v36 = vld [vmem:[%s1 + $0x34] sm:$0xf]
  %v37 = vld [vmem:[%s1 + $0x38] sm:$0xf]
  %v38 = vld [vmem:[%s1 + $0x3c] sm:$0xf]
  %v39 = vld [vmem:[%s2] sm:$0x1]
  %v41 = vlaneseq
  %v42 = vshrl.u32 %v41, 7
  %v43 = vsub.s32 0, %v42
  %v44 = vrot.slane %v39, %v43
  %v62 = vunpack.c.l.b16 %v23
  %v63 = vunpack.c.l.b16 %v24
  %v64 = vunpack.c.l.b16 %v25
  %v65 = vunpack.c.l.b16 %v26
  %v66 = vunpack.c.l.b16 %v27
  %v67 = vunpack.c.l.b16 %v28
  %v68 = vunpack.c.l.b16 %v29
  %v69 = vunpack.c.l.b16 %v30
  %v70 = vunpack.c.l.b16 %v31
  %v71 = vunpack.c.l.b16 %v32
  %v72 = vunpack.c.l.b16 %v33
  %v73 = vunpack.c.l.b16 %v34
  %v74 = vunpack.c.l.b16 %v35
  %v75 = vunpack.c.l.b16 %v36
  %v76 = vunpack.c.l.b16 %v37
  %v77 = vunpack.c.l.b16 %v38
  %v78 = vpack.c.b16 %v63, %v62
  %v79 = vpack.c.b16 %v65, %v64
  %v80 = vpack.c.b16 %v67, %v66
  %v81 = vpack.c.b16 %v69, %v68
  %v82 = vpack.c.b16 %v71, %v70
  %v83 = vpack.c.b16 %v73, %v72
  %v84 = vpack.c.b16 %v75, %v74
  %v85 = vpack.c.b16 %v77, %v76
  %94 = vmatprep.subr.bf16.mxu0 0
  %95 = vmatpush1.bf16.msra.mxu0 %v85
  %96 = vmatprep.subr.bf16.mxu0 0
  %97 = vmatpush1.bf16.msra.mxu0 %v84
  %98 = vmatprep.subr.bf16.mxu0 0
  %99 = vmatpush1.bf16.msra.mxu0 %v83
  %100 = vmatprep.subr.bf16.mxu0 0
  %101 = vmatpush1.bf16.msra.mxu0 %v82
  %102 = vmatprep.subr.bf16.mxu0 0
  %103 = vmatpush1.bf16.msra.mxu0 %v81
  %104 = vmatprep.subr.bf16.mxu0 0
  %105 = vmatpush1.bf16.msra.mxu0 %v80
  %106 = vmatprep.subr.bf16.mxu0 0
  %107 = vmatpush1.bf16.msra.mxu0 %v79
  %108 = vmatprep.subr.bf16.mxu0 0
  %109 = vmatpush1.bf16.msra.mxu0 %v78
  %110 = vmatprep.subr.bf16.mxu0 0
  %111 = vmatpush2.bf16.msra.mxu0 0
  %112 = vmatprep.subr.bf16.mxu0 0
  %113 = vmatpush2.bf16.msra.mxu0 0
  %114 = vmatprep.subr.bf16.mxu0 0
  %115 = vmatpush2.bf16.msra.mxu0 0
  %116 = vmatprep.subr.bf16.mxu0 0
  %117 = vmatpush2.bf16.msra.mxu0 0
  %118 = vmatprep.subr.bf16.mxu0 0
  %119 = vmatpush2.bf16.msra.mxu0 0
  %120 = vmatprep.subr.bf16.mxu0 0
  %121 = vmatpush2.bf16.msra.mxu0 0
  %122 = vmatprep.subr.bf16.mxu0 0
  %123 = vmatpush2.bf16.msra.mxu0 0
  %124 = vmatprep.subr.bf16.mxu0 0
  %125 = vmatpush2.bf16.msra.mxu0 0
  %126 = vmatprep.mubr.bf16.mxu0 0
  %127 = vmatmul.mubr.bf16.gmra.mxu0 %v22
  %v128 = vpop.f32.mrf.mxu0
  %v129 = vadd.f32 %v44, %v128
  %v130 = vpop.f32.mrf.mxu0
  %v131 = vpop.f32.mrf.mxu0
  %v132 = vpop.f32.mrf.mxu0
  %133 = vdwg.mxu0
  %v134 = vmax.f32 %v129, 0.0
  %v135 = vld [vmem:[%s3] sm:$0xff]
  %v136 = vld [vmem:[%s3 + $0x8] sm:$0xff]
  %v137 = vld [vmem:[%s3 + $0x10] sm:$0xff]
  %v138 = vld [vmem:[%s3 + $0x18] sm:$0xff]
  %v139 = vld [vmem:[%s3 + $0x20] sm:$0xff]
  %v140 = vld [vmem:[%s3 + $0x28] sm:$0xff]
  %v141 = vld [vmem:[%s3 + $0x30] sm:$0xff]
  %v142 = vld [vmem:[%s3 + $0x38] sm:$0xff]
  %v143 = vld [vmem:[%s3 + $0x40] sm:$0xff]
  %v144 = vld [vmem:[%s3 + $0x48] sm:$0xff]
  %v145 = vld [vmem:[%s3 + $0x50] sm:$0xff]
  %v146 = vld [vmem:[%s3 + $0x58] sm:$0xff]
  %v147 = vld [vmem:[%s3 + $0x60] sm:$0xff]
  %v148 = vld [vmem:[%s3 + $0x68] sm:$0xff]
  %v149 = vld [vmem:[%s3 + $0x70] sm:$0xff]
  %v150 = vld [vmem:[%s3 + $0x78] sm:$0xff]
  %v151 = vld [vmem:[%s4] sm:$0x1]
  %v153 = vlaneseq
  %v154 = vshrl.u32 %v153, 7
  %v155 = vsub.s32 0, %v154
  %v156 = vrot.slane %v151, %v155
  %158 = vmatprep.subr.mxu0 0.0
  %159 = vmatpush1.msra.mxu0 %v150
  %160 = vmatprep.subr.mxu0 0.0
  %161 = vmatpush1.msra.mxu0 %v149
  %162 = vmatprep.subr.mxu0 0.0
  %163 = vmatpush1.msra.mxu0 %v148
  %164 = vmatprep.subr.mxu0 0.0
  %165 = vmatpush1.msra.mxu0 %v147
  %166 = vmatprep.subr.mxu0 0.0
  %167 = vmatpush1.msra.mxu0 %v146
  %168 = vmatprep.subr.mxu0 0.0
  %169 = vmatpush1.msra.mxu0 %v145
  %170 = vmatprep.subr.mxu0 0.0
  %171 = vmatpush1.msra.mxu0 %v144
  %172 = vmatprep.subr.mxu0 0.0
  %173 = vmatpush1.msra.mxu0 %v143
  %174 = vmatprep.subr.mxu0 0.0
  %175 = vmatpush1.msra.mxu0 %v142
  %176 = vmatprep.subr.mxu0 0.0
  %177 = vmatpush1.msra.mxu0 %v141
  %178 = vmatprep.subr.mxu0 0.0
  %179 = vmatpush1.msra.mxu0 %v140
  %180 = vmatprep.subr.mxu0 0.0
  %181 = vmatpush1.msra.mxu0 %v139
  %182 = vmatprep.subr.mxu0 0.0
  %183 = vmatpush1.msra.mxu0 %v138
  %184 = vmatprep.subr.mxu0 0.0
  %185 = vmatpush1.msra.mxu0 %v137
  %186 = vmatprep.subr.mxu0 0.0
  %187 = vmatpush1.msra.mxu0 %v136
  %188 = vmatprep.subr.mxu0 0.0
  %189 = vmatpush1.msra.mxu0 %v135
  %190 = vmatprep.subr.mxu0 0.0
  %191 = vmatpush2.msra.mxu0 0.0
  %192 = vmatprep.subr.mxu0 0.0
  %193 = vmatpush2.msra.mxu0 0.0
  %194 = vmatprep.subr.mxu0 0.0
  %195 = vmatpush2.msra.mxu0 0.0
  %196 = vmatprep.subr.mxu0 0.0
  %197 = vmatpush2.msra.mxu0 0.0
  %198 = vmatprep.subr.mxu0 0.0
  %199 = vmatpush2.msra.mxu0 0.0
  %200 = vmatprep.subr.mxu0 0.0
  %201 = vmatpush2.msra.mxu0 0.0
  %202 = vmatprep.subr.mxu0 0.0
  %203 = vmatpush2.msra.mxu0 0.0
  %204 = vmatprep.subr.mxu0 0.0
  %205 = vmatpush2.msra.mxu0 0.0
  %206 = vmatprep.subr.mxu0 0.0
  %207 = vmatpush2.msra.mxu0 0.0
  %208 = vmatprep.subr.mxu0 0.0
  %209 = vmatpush2.msra.mxu0 0.0
  %210 = vmatprep.subr.mxu0 0.0
  %211 = vmatpush2.msra.mxu0 0.0
  %212 = vmatprep.subr.mxu0 0.0
  %213 = vmatpush2.msra.mxu0 0.0
  %214 = vmatprep.subr.mxu0 0.0
  %215 = vmatpush2.msra.mxu0 0.0
  %216 = vmatprep.subr.mxu0 0.0
  %217 = vmatpush2.msra.mxu0 0.0
  %218 = vmatprep.subr.mxu0 0.0
  %219 = vmatpush2.msra.mxu0 0.0
  %220 = vmatprep.subr.mxu0 0.0
  %221 = vmatpush2.msra.mxu0 0.0
  %222 = vmatprep.mubr.f32.mxu0 0.0
  %223 = vmatmul.mubr.f32.gmra.mxu0 %v134
  %v224 = vpop.f32.mrf.mxu0
  %v225 = vadd.f32 %v156, %v224
  %v226 = vpop.f32.mrf.mxu0
  %227 = vdwg.mxu0
  %v228 = vxor.u32 %v225, 2147483648
  %v229 = vmul.f32 %v228, 1.442695
  %v230 = vpow.pop %v229
  %v231 = vadd.f32 %v230, 1.0
  %v232 = vrcp.pop %v231
  %v233 = vmul.f32 1.0, %v232
  %vm234 = vcmask 31744
  %235 = vst.msk [vmem:[%s5] sm:$0xff] %vm234, %v233
  // Predicated region
  $region22: #{tpu_custom_call.1} parent=0 // pred_check
    _
  $region23: #{tpu_custom_call.1} parent=0 // pred_check_branch
    %237 = sbr.rel (0) target = $region25
  $region24: #{tpu_custom_call.1} parent=0 // pred_region
    _
  $region25: #{tpu_custom_call.1} parent=0 // pred_fallthru
    _
  // Predicated region
  $region26: #{tpu_custom_call.1} parent=0 // pred_check
    _
  $region27: #{tpu_custom_call.1} parent=0 // pred_check_branch
    %239 = sbr.rel (0) target = $region29
  $region28: #{tpu_custom_call.1} parent=0 // pred_region
    _
  $region29: #{tpu_custom_call.1} parent=0 // pred_fallthru
    _

</llo_original>
